<compile_context>
chip_gen: v7x
topology: tpu7x:2x2x1
jax: 0.10.0
libtpu: 0.0.40
codegen_flags: <defaults>
</compile_context>

<pallas_src>
import functools

import jax
import jax.numpy as jnp
import numpy as np
from jax.experimental import pallas as pl
from jax.experimental.pallas import tpu as pltpu


# ----------------------------- small helpers -----------------------------
def _round_up(x, m):
    return ((x + m - 1) // m) * m


def _snap_pow2_tile(requested):
    """Largest 128*2^k <= requested (keeps every tile lane/sublane aligned)."""
    t = 128
    while t * 2 <= requested:
        t *= 2
    return t


def _choose_tile(n_pad, requested):
    """Largest 128*2^k tile <= requested that divides n_pad (n_pad % 128 == 0)."""
    t = min(_snap_pow2_tile(requested), n_pad)
    while t > 128 and n_pad % t != 0:
        t //= 2
    return t


def _vmem_budget_bytes():
    """Per-core VMEM budget with headroom for compiler scratch (v7x: 64 MiB/TC)."""
    try:
        cap = int(pltpu.get_tpu_info().vmem_capacity_bytes)
    except Exception:
        cap = 64 * 1024 * 1024          # conservative fallback (v7x per-TC size)
    return (cap * 3) // 4


def _exp_dtype_for_device():
    """bf16 exp on v6e/v7x (EUP has a bf16 path); f32 elsewhere (v5e does not)."""
    try:
        kind = jax.devices()[0].device_kind.lower()
    except Exception:
        return jnp.float32
    if "v6" in kind or "v7" in kind:
        return jnp.bfloat16
    return jnp.float32


# ----------------------------- kernels -----------------------------
def _gat_project_kernel(x_ref, w_ref, amat_ref, xp_ref, alpha_ref):
    # bf16 operands into the MXU, f32 accumulation.
    xp = jnp.dot(x_ref[...], w_ref[...], preferred_element_type=jnp.float32)   # [TM, H*C]
    # Fused per-head src/dst logit reductions: a single [H*C, 2H] matmul.
    alpha_ref[...] = jnp.dot(xp, amat_ref[...], preferred_element_type=jnp.float32)
    xp_ref[...] = xp.astype(jnp.bfloat16)


def _gat_aggregate_kernel(adst_ref, asrcT_ref, xp_ref, adj_ref, bias_ref, out_ref,
                          m_ref, l_ref, acc_ref, *,
                          heads, out_channels, concat, negative_slope,
                          apply_out_act, exp_dtype):
    c = out_channels
    kk = pl.program_id(1)
    neg_big = jnp.float32(-1e30)

    @pl.when(kk == 0)
    def _init():
        # -1e30 (not 0 / not -inf): m tracks the true running row max of real
        # logits (masked -1e30 fill never dominates it), and corr=exp(m_old-m_new)
        # exactly wipes anything accumulated before a row sees its first edge.
        m_ref[...] = jnp.full(m_ref.shape, -1e30, dtype=m_ref.dtype)
        l_ref[...] = jnp.zeros(l_ref.shape, dtype=l_ref.dtype)
        acc_ref[...] = jnp.zeros(acc_ref.shape, dtype=acc_ref.dtype)

    mask = adj_ref[...] > 0                  # [TM, TK] bool from the int8 stream
    adst = adst_ref[...]                     # [TM, H]   single full-width loads
    asrc = asrcT_ref[...]                    # [H, TK]
    m_all = m_ref[...]
    l_all = l_ref[...]
    acc_all = acc_ref[...]

    m_cols, l_cols, acc_slabs = [], [], []
    for h in range(heads):                   # heads is small & static
        sl = slice(h * c, (h + 1) * c)
        e = adst[:, h:h + 1] + asrc[h:h + 1, :]                  # [TM, TK] broadcast add
        e = jnp.maximum(e, negative_slope * e)                   # LeakyReLU as one vmax
        e = jnp.where(mask, e, neg_big)                          # single masking pass
        m_old = m_all[:, h:h + 1]
        m_new = jnp.maximum(m_old, jnp.max(e, axis=-1, keepdims=True))
        corr = jnp.exp(m_old - m_new)                            # f32 [TM, 1]
        p = jnp.exp((e - m_new).astype(exp_dtype))               # bf16 exp on v6e/v7x EUP
        l_cols.append(corr * l_all[:, h:h + 1]
                      + jnp.sum(p.astype(jnp.float32), axis=-1, keepdims=True))
        agg = jnp.dot(p.astype(jnp.bfloat16), xp_ref[:, sl],
                      preferred_element_type=jnp.float32)        # [TM, C] on the MXU
        acc_slabs.append(corr * acc_all[:, sl] + agg)
        m_cols.append(m_new)

    # One full-width store per state ref (no per-head width-1 / width-C masked vst).
    m_new_all = m_cols[0] if heads == 1 else jnp.concatenate(m_cols, axis=-1)
    l_new_all = l_cols[0] if heads == 1 else jnp.concatenate(l_cols, axis=-1)
    acc_new_all = acc_slabs[0] if heads == 1 else jnp.concatenate(acc_slabs, axis=-1)
    m_ref[...] = m_new_all
    l_ref[...] = l_new_all
    acc_ref[...] = acc_new_all

    @pl.when(kk == pl.num_programs(1) - 1)
    def _finalize():
        # Use the locals (they ARE the final state on the last block): no acc/l reload.
        inv = pl.reciprocal(l_new_all, approx=True)              # EUP, not a VPU divide
        if concat:
            if heads == 1:
                out = acc_slabs[0] * inv
            else:
                out = jnp.concatenate(
                    [acc_slabs[h] * inv[:, h:h + 1] for h in range(heads)], axis=-1)
        else:
            out = acc_slabs[0] * inv[:, 0:1]
            for h in range(1, heads):
                out = out + acc_slabs[h] * inv[:, h:h + 1]
            if heads > 1:
                out = out * (1.0 / heads)                        # mean over heads
        out = out + bias_ref[...]
        if apply_out_act:                                        # module-level LeakyReLU(0.2)
            out = jnp.maximum(out, negative_slope * out)
        out_ref[...] = out.astype(out_ref.dtype)                 # single lane-dense store


# ----------------------------- layer wrapper -----------------------------
def gat_layer(x, w, att_src, att_dst, bias, adj_i8, *, heads, out_channels, concat,
              negative_slope=0.2, apply_out_act=False, exp_dtype=jnp.float32,
              tile_m=256, tile_k=1024, proj_tile=1024):
    n, fin = x.shape                      # n is already padded to a multiple of 128
    hc = heads * out_channels
    out_dim = hc if concat else out_channels

    # ---- tile selection: every tile is 128*2^k and divides n ----
    tm = _choose_tile(n, tile_m)          # destination-row tile
    tk = _choose_tile(n, tile_k)          # source-column tile (online softmax)
    proj_tm = _choose_tile(n, proj_tile)  # projection kernel gets its own bigger rows
    if n // tm < 2 and tm > 128:          # keep >= 2 row tiles so v7x's 2 TCs both work
        tm //= 2

    budget = _vmem_budget_bytes()

    def agg_bytes(tm_, tk_):              # inputs counted once with their 2x buffers
        return (2 * tm_ * tk_ * 1              # adjacency tile (int8)
                + 2 * tk_ * hc * 2             # projected features (bf16)
                + 2 * heads * tk_ * 4          # src logits
                + 2 * tm_ * heads * 4          # dst logits
                + 2 * tm_ * out_dim * 4        # output tile
                + tm_ * (2 * heads + hc) * 4   # m / l / acc scratch
                + 8 * tm_ * tk_ * 4)           # live f32 [TM,TK] temporaries headroom

    while agg_bytes(tm, tk) > budget and tk > 128:
        tk //= 2
    while agg_bytes(tm, tk) > budget and tm > 128:
        tm //= 2
    vmem_limit = int(min(max(agg_bytes(tm, tk), 32 * 1024 * 1024), budget))

    # Fused block-diagonal logit projection matrix: cols [0:H] -> dst, [H:2H] -> src.
    eye = jnp.eye(heads, dtype=jnp.float32)
    adst_mat = (att_dst.astype(jnp.float32)[:, :, None] * eye[:, None, :]).reshape(hc, heads)
    asrc_mat = (att_src.astype(jnp.float32)[:, :, None] * eye[:, None, :]).reshape(hc, heads)
    amat = jnp.concatenate([adst_mat, asrc_mat], axis=1)          # [H*C, 2H]

    # --- kernel 1: feature projection + attention logits (row-tiled) ---
    xp, alpha = pl.pallas_call(
        _gat_project_kernel,
        out_shape=(jax.ShapeDtypeStruct((n, hc), jnp.bfloat16),
                   jax.ShapeDtypeStruct((n, 2 * heads), jnp.float32)),
        grid=(n // proj_tm,),
        in_specs=[pl.BlockSpec((proj_tm, fin), lambda i: (i, 0)),
                  pl.BlockSpec((fin, hc), lambda i: (0, 0)),
                  pl.BlockSpec((hc, 2 * heads), lambda i: (0, 0))],
        out_specs=(pl.BlockSpec((proj_tm, hc), lambda i: (i, 0)),
                   pl.BlockSpec((proj_tm, 2 * heads), lambda i: (i, 0))),
        compiler_params=pltpu.CompilerParams(dimension_semantics=("parallel",)),
    )(x.astype(jnp.bfloat16), w.astype(jnp.bfloat16), amat)

    a_dst = alpha[:, :heads]                       # [N, H]
    a_src_t = jnp.transpose(alpha[:, heads:])      # [H, N] — tiny, hoisted out of the kernel
    bias2d = bias.reshape(1, out_dim).astype(jnp.float32)

    kernel = functools.partial(
        _gat_aggregate_kernel, heads=heads, out_channels=out_channels, concat=concat,
        negative_slope=negative_slope, apply_out_act=apply_out_act, exp_dtype=exp_dtype)

    # --- kernel 2: masked edge-softmax + aggregation (online over src-col blocks) ---
    return pl.pallas_call(
        kernel,
        out_shape=jax.ShapeDtypeStruct((n, out_dim), jnp.float32),
        grid=(n // tm, n // tk),
        in_specs=[pl.BlockSpec((tm, heads), lambda i, k: (i, 0)),     # dst logits
                  pl.BlockSpec((heads, tk), lambda i, k: (0, k)),     # src logits (pre-transposed)
                  pl.BlockSpec((tk, hc), lambda i, k: (k, 0)),        # projected features (bf16)
                  pl.BlockSpec((tm, tk), lambda i, k: (i, k)),        # adjacency tile (int8)
                  pl.BlockSpec((1, out_dim), lambda i, k: (0, 0))],   # bias
        out_specs=pl.BlockSpec((tm, out_dim), lambda i, k: (i, 0)),
        scratch_shapes=[pltpu.VMEM((tm, heads), jnp.float32),   # running max
                        pltpu.VMEM((tm, heads), jnp.float32),   # running sum
                        pltpu.VMEM((tm, hc), jnp.float32)],     # per-head accumulator
        compiler_params=pltpu.CompilerParams(
            dimension_semantics=("parallel", "arbitrary"),
            vmem_limit_bytes=vmem_limit),
    )(a_dst, a_src_t, xp, adj_i8, bias2d)


def my_gat_forward(x, adj, params, *, tile_m=256, tile_k=1024, proj_tile=1024):
    n = x.shape[0]
    n_pad = _round_up(max(n, 128), 128)
    if n_pad != n:
        # Pad to a tile multiple; padded rows get a self-loop so every softmax row
        # has mass (keeps padded rows finite; they are sliced away at the end).
        x = jnp.pad(x, ((0, n_pad - n), (0, 0)))
        adj_p = jnp.zeros((n_pad, n_pad), adj.dtype).at[:n, :n].set(adj)
        pad_idx = jnp.arange(n, n_pad)
        adj = adj_p.at[pad_idx, pad_idx].set(1)
    adj_i8 = (adj > 0).astype(jnp.int8)     # O(N^2) stream compressed + converted ONCE
    exp_dtype = _exp_dtype_for_device()

    # conv1: GATConv(in_dim, hidden, heads=4, concat=True) + LeakyReLU(0.2)
    h = gat_layer(x, params["w1"], params["as1"], params["ad1"], params["b1"], adj_i8,
                  heads=4, out_channels=params["hidden"], concat=True,
                  apply_out_act=True, exp_dtype=exp_dtype,
                  tile_m=tile_m, tile_k=tile_k, proj_tile=proj_tile)
    # conv2: GATConv(4*hidden, out_dim, heads=1, concat=False)
    out = gat_layer(h, params["w2"], params["as2"], params["ad2"], params["b2"], adj_i8,
                    heads=1, out_channels=params["out_dim"], concat=False,
                    apply_out_act=False, exp_dtype=exp_dtype,
                    tile_m=tile_m, tile_k=tile_k, proj_tile=proj_tile)
    return out[:n]


# ----------------------------- pure-JAX reference -----------------------------
def _ref_gat_layer(x, w, att_src, att_dst, bias, adj, heads, c, concat, act):
    xp = (x @ w).reshape(x.shape[0], heads, c)
    a_s = jnp.sum(xp * att_src[None], axis=-1)            # [N, H]
    a_d = jnp.sum(xp * att_dst[None], axis=-1)            # [N, H]
    e = a_d.T[:, :, None] + a_s.T[:, None, :]             # [H, N(dst), N(src)]
    e = jnp.where(e >= 0, e, 0.2 * e)
    e = jnp.where(adj[None] > 0, e, -1e30)
    p = jnp.exp(e - jnp.max(e, axis=-1, keepdims=True)) * adj[None]
    attn = p / jnp.sum(p, axis=-1, keepdims=True)
    o = jnp.einsum("hij,jhc->ihc", attn, xp)
    o = o.reshape(x.shape[0], heads * c) if concat else o.mean(axis=1)
    o = o + bias[None]
    return jnp.where(o >= 0, o, 0.2 * o) if act else o


def _ref_forward(x, adj, p):
    h = _ref_gat_layer(x, p["w1"], p["as1"], p["ad1"], p["b1"], adj, 4, p["hidden"], True, True)
    return _ref_gat_layer(h, p["w2"], p["as2"], p["ad2"], p["b2"], adj, 1, p["out_dim"], False, False)


if __name__ == "__main__":
    N, in_dim, hidden_dim, out_dim, heads = 256, 32, 32, 16, 4

    key = jax.random.PRNGKey(0)
    ks = jax.random.split(key, 9)
    x = jax.random.normal(ks[0], (N, in_dim), jnp.float32)

    # deterministic synthetic parameters (shapes follow PyG GATConv)
    params = {
        "hidden": hidden_dim, "out_dim": out_dim,
        "w1": 0.2 * jax.random.normal(ks[1], (in_dim, heads * hidden_dim), jnp.float32),
        "as1": 0.2 * jax.random.normal(ks[2], (heads, hidden_dim), jnp.float32),
        "ad1": 0.2 * jax.random.normal(ks[3], (heads, hidden_dim), jnp.float32),
        "b1": 0.1 * jax.random.normal(ks[4], (heads * hidden_dim,), jnp.float32),
        "w2": 0.1 * jax.random.normal(ks[5], (heads * hidden_dim, out_dim), jnp.float32),
        "as2": 0.2 * jax.random.normal(ks[6], (1, out_dim), jnp.float32),
        "ad2": 0.2 * jax.random.normal(ks[7], (1, out_dim), jnp.float32),
        "b2": 0.1 * jax.random.normal(ks[8], (out_dim,), jnp.float32),
    }

    # small deterministic graph: bidirectional ring + a few chords
    src, dst = [], []
    for i in range(N):
        src += [i, (i + 1) % N]
        dst += [(i + 1) % N, i]
    for i in range(0, N, 2):
        src.append(i)
        dst.append((i + 5) % N)
    edge_index = jnp.asarray(np.stack([src, dst]), jnp.int32)        # [2, E]

    # glue: dense adjacency with self-loops (PyG GATConv adds self-loops by default)
    adj = jnp.zeros((N, N), jnp.float32).at[edge_index[1], edge_index[0]].set(1.0)
    adj = jnp.maximum(adj, jnp.eye(N, dtype=jnp.float32))

    # tile_m/tile_k chosen small so the demo exercises a real (2, 2) grid at N=256;
    # defaults (256/1024) are the sizes intended for realistic graphs.
    out = my_gat_forward(x, adj, params, tile_m=128, tile_k=128)
    out = jax.block_until_ready(out)

    ref = _ref_forward(x, adj, params)
    # bf16 MXU operands, bf16 exp (on v6e/v7x) and approx reciprocal => small
    # intentional drift vs the f32 reference.
    np.testing.assert_allclose(np.asarray(out), np.asarray(ref), rtol=6e-2, atol=6e-2)
    assert out.shape == (N, out_dim)
    print("KERNEL_OK")
</pallas_src>

<mosaic_0001>
module attributes {stable_mosaic.version = 11 : i64} {
  func.func @_gat_project_kernel(%arg0: i32, %arg1: memref<256x32xbf16, #tpu.memory_space<vmem>>, %arg2: memref<32x128xbf16, #tpu.memory_space<vmem>>, %arg3: memref<128x8xf32, #tpu.memory_space<vmem>>, %arg4: memref<256x128xbf16, #tpu.memory_space<vmem>>, %arg5: memref<256x8xf32, #tpu.memory_space<vmem>>) attributes {dimension_semantics = [#tpu.dimension_semantics<parallel>], iteration_bounds = array<i64: 1>, scalar_prefetch = 0 : i64, scratch_operands = 0 : i64, tpu.core_type = #tpu.core_type<tc>, window_params = [{transform_indices = @transform_0, window_bounds = array<i64: 256, 32>}, {pipeline_mode = #tpu.pipeline_mode<synchronous>, transform_indices = @transform_1, window_bounds = array<i64: 32, 128>}, {pipeline_mode = #tpu.pipeline_mode<synchronous>, transform_indices = @transform_2, window_bounds = array<i64: 128, 8>}, {transform_indices = @transform_3, window_bounds = array<i64: 256, 128>}, {transform_indices = @transform_4, window_bounds = array<i64: 256, 8>}]} {
    %c0 = arith.constant 0 : index
    %c0_0 = arith.constant 0 : index
    %0 = vector.load %arg1[%c0, %c0_0] : memref<256x32xbf16, #tpu.memory_space<vmem>>, vector<256x32xbf16>
    %c0_1 = arith.constant 0 : index
    %c0_2 = arith.constant 0 : index
    %1 = vector.load %arg2[%c0_1, %c0_2] : memref<32x128xbf16, #tpu.memory_space<vmem>>, vector<32x128xbf16>
    %cst = arith.constant dense<0.000000e+00> : vector<256x128xf32>
    %2 = tpu.matmul %0, %1, %cst {dimension_numbers = #tpu.dot_dimension_numbers<[1], [0], [0], [1], [0, 0, 1, 1], [], []>} : vector<256x32xbf16>, vector<32x128xbf16>, vector<256x128xf32> -> vector<256x128xf32>
    %c0_3 = arith.constant 0 : index
    %c0_4 = arith.constant 0 : index
    %3 = vector.load %arg3[%c0_3, %c0_4] : memref<128x8xf32, #tpu.memory_space<vmem>>, vector<128x8xf32>
    %cst_5 = arith.constant dense<0.000000e+00> : vector<256x8xf32>
    %4 = tpu.matmul %2, %3, %cst_5 {dimension_numbers = #tpu.dot_dimension_numbers<[1], [0], [0], [1], [0, 0, 1, 1], [], []>} : vector<256x128xf32>, vector<128x8xf32>, vector<256x8xf32> -> vector<256x8xf32>
    %c0_6 = arith.constant 0 : index
    %c0_7 = arith.constant 0 : index
    %5 = vector.load %arg5[%c0_6, %c0_7] : memref<256x8xf32, #tpu.memory_space<vmem>>, vector<256x8xf32>
    tpu.vector_store %arg5[%c0_6, %c0_7], %4 {strides = array<i32>} : memref<256x8xf32, #tpu.memory_space<vmem>>, vector<256x8xf32>,
    %6 = arith.truncf %2 : vector<256x128xf32> to vector<256x128xbf16>
    %c0_8 = arith.constant 0 : index
    %c0_9 = arith.constant 0 : index
    %7 = vector.load %arg4[%c0_8, %c0_9] : memref<256x128xbf16, #tpu.memory_space<vmem>>, vector<256x128xbf16>
    tpu.vector_store %arg4[%c0_8, %c0_9], %6 {strides = array<i32>} : memref<256x128xbf16, #tpu.memory_space<vmem>>, vector<256x128xbf16>,
    return
  }
  func.func @transform_0(%arg0: i32) -> (i32, i32) {
    %c0_i32 = arith.constant 0 : i32
    %c0_i32_0 = arith.constant 0 : i32
    return %arg0, %c0_i32 : i32, i32
  }
  func.func @transform_1(%arg0: i32) -> (i32, i32) {
    %c0_i32 = arith.constant 0 : i32
    %c0_i32_0 = arith.constant 0 : i32
    %c0_i32_1 = arith.constant 0 : i32
    return %c0_i32, %c0_i32_0 : i32, i32
  }
  func.func @transform_2(%arg0: i32) -> (i32, i32) {
    %c0_i32 = arith.constant 0 : i32
    %c0_i32_0 = arith.constant 0 : i32
    %c0_i32_1 = arith.constant 0 : i32
    return %c0_i32, %c0_i32_0 : i32, i32
  }
  func.func @transform_3(%arg0: i32) -> (i32, i32) {
    %c0_i32 = arith.constant 0 : i32
    %c0_i32_0 = arith.constant 0 : i32
    return %arg0, %c0_i32 : i32, i32
  }
  func.func @transform_4(%arg0: i32) -> (i32, i32) {
    %c0_i32 = arith.constant 0 : i32
    %c0_i32_0 = arith.constant 0 : i32
    return %arg0, %c0_i32 : i32, i32
  }
}

</mosaic_0001>

<llo_original>
// kernel: tpu_custom_call.1
$region0: #{tpu_custom_call.1}
  #allocation0 [shape = 'u32[]', space=smem, size = 0x4, offset = 0x4, fixed_abs, tag = 'smem constant byte address 0x4 - core index']
  #allocation1 [shape = 'u32[144,128]{1,0:T(1,128)}', space=vmem, size = 0x12000, scoped, tag = 'internal scratch']
  %s0 = inlined_call_operand.vmem [shape: bf16[256,32], index: 0, kind: input, shape index: {}]
  %s1 = inlined_call_operand.vmem [shape: bf16[32,128], index: 1, kind: input, shape index: {}]
  %s2 = inlined_call_operand.vmem [shape: f32[128,8], index: 2, kind: input, shape index: {}]
  %s3 = inlined_call_operand.hbm [shape: bf16[256,128], index: 3, kind: output, shape index: {0}]
  %s4 = inlined_call_operand.vmem [shape: f32[256,8], index: 4, kind: output, shape index: {1}]
  %5 = xla_tuple %s3, %s4
  %s6 = sld [smem:[#allocation0]]
  $region30: #{tpu_custom_call.1} parent=0
    _
  %s8 = ssub.s32 1, %s6
  %s9 = scalar_select 0, %s8, %s6
  $region1: #{tpu_custom_call.1} parent=0
    #allocation2 [shape = 'u8[65536]{0}', space=vmem, size = 0x10000, scoped, tag = 'output window, operand 0, single buffered']
    #allocation3 [shape = 's32[1]{0}', space=sflag, size = 0x4, scoped, tag = 'scoped memory for tpu_custom_call.1']
    %10 = vsyncpa [#allocation3], 0
    // Predicated region
    $region2: #{tpu_custom_call.1} parent=1 // pred_check
      _
    $region3: #{tpu_custom_call.1} parent=1 // pred_check_branch
      %12 = sbr.rel (0) target = $region5
    $region4: #{tpu_custom_call.1} parent=1 // pred_region
      _
    $region5: #{tpu_custom_call.1} parent=1 // pred_fallthru
      _
    // Predicated region
    $region6: #{tpu_custom_call.1} parent=1 // pred_check
      _
    $region7: #{tpu_custom_call.1} parent=1 // pred_check_branch
      %14 = sbr.rel (0) target = $region9
    $region8: #{tpu_custom_call.1} parent=1 // pred_region
      _
    $region9: #{tpu_custom_call.1} parent=1 // pred_fallthru
      _
    // Predicated region
    $region10: #{tpu_custom_call.1} parent=1 // pred_check
      _
    $region11: #{tpu_custom_call.1} parent=1 // pred_check_branch
      %16 = sbr.rel (0) target = $region13
    $region12: #{tpu_custom_call.1} parent=1 // pred_region
      _
    $region13: #{tpu_custom_call.1} parent=1 // pred_fallthru
      _
    %v18 = vld [vmem:[%s0] sm:$0xf]
    %v19 = vld [vmem:[%s0 + $0x4] sm:$0xf]
    %v20 = vld [vmem:[%s0 + $0x8] sm:$0xf]
    %v21 = vld [vmem:[%s0 + $0xc] sm:$0xf]
    %v22 = vld [vmem:[%s0 + $0x10] sm:$0xf]
    %v23 = vld [vmem:[%s0 + $0x14] sm:$0xf]
    %v24 = vld [vmem:[%s0 + $0x18] sm:$0xf]
    %v25 = vld [vmem:[%s0 + $0x1c] sm:$0xf]
    %v26 = vld [vmem:[%s0 + $0x20] sm:$0xf]
    %v27 = vld [vmem:[%s0 + $0x24] sm:$0xf]
    %v28 = vld [vmem:[%s0 + $0x28] sm:$0xf]
    %v29 = vld [vmem:[%s0 + $0x2c] sm:$0xf]
    %v30 = vld [vmem:[%s0 + $0x30] sm:$0xf]
    %v31 = vld [vmem:[%s0 + $0x34] sm:$0xf]
    %v32 = vld [vmem:[%s0 + $0x38] sm:$0xf]
    %v33 = vld [vmem:[%s0 + $0x3c] sm:$0xf]
    %v34 = vld [vmem:[%s0 + $0x40] sm:$0xf]
    %v35 = vld [vmem:[%s0 + $0x44] sm:$0xf]
    %v36 = vld [vmem:[%s0 + $0x48] sm:$0xf]
    %v37 = vld [vmem:[%s0 + $0x4c] sm:$0xf]
    %v38 = vld [vmem:[%s0 + $0x50] sm:$0xf]
    %v39 = vld [vmem:[%s0 + $0x54] sm:$0xf]
    %v40 = vld [vmem:[%s0 + $0x58] sm:$0xf]
    %v41 = vld [vmem:[%s0 + $0x5c] sm:$0xf]
    %v42 = vld [vmem:[%s0 + $0x60] sm:$0xf]
    %v43 = vld [vmem:[%s0 + $0x64] sm:$0xf]
    %v44 = vld [vmem:[%s0 + $0x68] sm:$0xf]
    %v45 = vld [vmem:[%s0 + $0x6c] sm:$0xf]
    %v46 = vld [vmem:[%s0 + $0x70] sm:$0xf]
    %v47 = vld [vmem:[%s0 + $0x74] sm:$0xf]
    %v48 = vld [vmem:[%s0 + $0x78] sm:$0xf]
    %v49 = vld [vmem:[%s0 + $0x7c] sm:$0xf]
    %v50 = vld [vmem:[%s1] sm:$0xf]
    %v51 = vld [vmem:[%s1 + $0x4] sm:$0xf]
    %v52 = vld [vmem:[%s1 + $0x8] sm:$0xf]
    %v53 = vld [vmem:[%s1 + $0xc] sm:$0xf]
    %v86 = vunpack.c.l.b16 %v18
    %v87 = vunpack.c.l.b16 %v19
    %v88 = vunpack.c.l.b16 %v20
    %v89 = vunpack.c.l.b16 %v21
    %v90 = vunpack.c.l.b16 %v22
    %v91 = vunpack.c.l.b16 %v23
    %v92 = vunpack.c.l.b16 %v24
    %v93 = vunpack.c.l.b16 %v25
    %v94 = vunpack.c.l.b16 %v26
    %v95 = vunpack.c.l.b16 %v27
    %v96 = vunpack.c.l.b16 %v28
    %v97 = vunpack.c.l.b16 %v29
    %v98 = vunpack.c.l.b16 %v30
    %v99 = vunpack.c.l.b16 %v31
    %v100 = vunpack.c.l.b16 %v32
    %v101 = vunpack.c.l.b16 %v33
    %v102 = vunpack.c.l.b16 %v34
    %v103 = vunpack.c.l.b16 %v35
    %v104 = vunpack.c.l.b16 %v36
    %v105 = vunpack.c.l.b16 %v37
    %v106 = vunpack.c.l.b16 %v38
    %v107 = vunpack.c.l.b16 %v39
    %v108 = vunpack.c.l.b16 %v40
    %v109 = vunpack.c.l.b16 %v41
    %v110 = vunpack.c.l.b16 %v42
    %v111 = vunpack.c.l.b16 %v43
    %v112 = vunpack.c.l.b16 %v44
    %v113 = vunpack.c.l.b16 %v45
    %v114 = vunpack.c.l.b16 %v46
    %v115 = vunpack.c.l.b16 %v47
    %v116 = vunpack.c.l.b16 %v48
    %v117 = vunpack.c.l.b16 %v49
    %v118 = vpack.c.b16 %v87, %v86
    %v119 = vpack.c.b16 %v89, %v88
    %v120 = vpack.c.b16 %v91, %v90
    %v121 = vpack.c.b16 %v93, %v92
    %v122 = vpack.c.b16 %v95, %v94
    %v123 = vpack.c.b16 %v97, %v96
    %v124 = vpack.c.b16 %v99, %v98
    %v125 = vpack.c.b16 %v101, %v100
    %v126 = vpack.c.b16 %v103, %v102
    %v127 = vpack.c.b16 %v105, %v104
    %v128 = vpack.c.b16 %v107, %v106
    %v129 = vpack.c.b16 %v109, %v108
    %v130 = vpack.c.b16 %v111, %v110
    %v131 = vpack.c.b16 %v113, %v112
    %v132 = vpack.c.b16 %v115, %v114
    %v133 = vpack.c.b16 %v117, %v116
    %v138 = vunpack.c.l.b16 %v50
    %v139 = vunpack.c.l.b16 %v51
    %v140 = vunpack.c.l.b16 %v52
    %v141 = vunpack.c.l.b16 %v53
    %v142 = vpack.c.b16 %v139, %v138
    %v143 = vpack.c.b16 %v141, %v140
    %vm146 = vcmask 261120
    %v148 = vsel %vm146, %v118, 0
    %v151 = vsel %vm146, %v119, 0
    %v154 = vsel %vm146, %v120, 0
    %v157 = vsel %vm146, %v121, 0
    %v160 = vsel %vm146, %v122, 0
    %v163 = vsel %vm146, %v123, 0
    %v166 = vsel %vm146, %v124, 0
    %v169 = vsel %vm146, %v125, 0
    %v172 = vsel %vm146, %v126, 0
    %v175 = vsel %vm146, %v127, 0
    %v178 = vsel %vm146, %v128, 0
    %v181 = vsel %vm146, %v129, 0
    %v184 = vsel %vm146, %v130, 0
    %v187 = vsel %vm146, %v131, 0
    %v190 = vsel %vm146, %v132, 0
    %v193 = vsel %vm146, %v133, 0
    %195 = vmatprep.subr.bf16.mxu0 0
    %196 = vmatpush1.bf16.msra.mxu0 %v142
    %197 = vmatprep.subr.bf16.mxu0 0
    %198 = vmatpush1.bf16.msra.mxu0 %v143
    %199 = vmatprep.subr.bf16.mxu0 0
    %200 = vmatpush1.bf16.msra.mxu0 0
    %201 = vmatprep.subr.bf16.mxu0 0
    %202 = vmatpush1.bf16.msra.mxu0 0
    %203 = vmatprep.subr.bf16.mxu0 0
    %204 = vmatpush1.bf16.msra.mxu0 0
    %205 = vmatprep.subr.bf16.mxu0 0
    %206 = vmatpush1.bf16.msra.mxu0 0
    %207 = vmatprep.subr.bf16.mxu0 0
    %208 = vmatpush1.bf16.msra.mxu0 0
    %209 = vmatprep.subr.bf16.mxu0 0
    %210 = vmatpush1.bf16.msra.mxu0 0
    %211 = vmatprep.subr.bf16.mxu0 0
    %212 = vmatpush1.bf16.msra.mxu0 0
    %213 = vmatprep.subr.bf16.mxu0 0
    %214 = vmatpush1.bf16.msra.mxu0 0
    %215 = vmatprep.subr.bf16.mxu0 0
    %216 = vmatpush1.bf16.msra.mxu0 0
    %217 = vmatprep.subr.bf16.mxu0 0
    %218 = vmatpush1.bf16.msra.mxu0 0
    %219 = vmatprep.subr.bf16.mxu0 0
    %220 = vmatpush1.bf16.msra.mxu0 0
    %221 = vmatprep.subr.bf16.mxu0 0
    %222 = vmatpush1.bf16.msra.mxu0 0
    %223 = vmatprep.subr.bf16.mxu0 0
    %224 = vmatpush1.bf16.msra.mxu0 0
    %225 = vmatprep.subr.bf16.mxu0 0
    %226 = vmatpush1.bf16.msra.mxu0 0
    %227 = vmatprep.mubr.bf16.mxu0 0
    %228 = vmatmul.mubr.bf16.gmra.mrb[0].mxu0 %v148
    %v229 = vpop.f32.mrb[0].mxu0
    %v230 = vadd.f32 0.0, %v229
    %v231 = vpop.f32.mrb[0].mxu0
    %v232 = vpop.f32.mrb[0].mxu0
    %v233 = vadd.f32 0.0, %v232
    %v234 = vpop.f32.mrb[0].mxu0
    %235 = vmatprep.mubr.bf16.mxu0 0
    %236 = vmatmul.mubr.bf16.gmra.mrb[0].mxu0 %v151
    %v237 = vpop.f32.mrb[0].mxu0
    %v238 = vadd.f32 0.0, %v237
    %v239 = vpop.f32.mrb[0].mxu0
    %v240 = vpop.f32.mrb[0].mxu0
    %v241 = vadd.f32 0.0, %v240
    %v242 = vpop.f32.mrb[0].mxu0
    %243 = vmatprep.mubr.bf16.mxu0 0
    %244 = vmatmul.mubr.bf16.gmra.mrb[0].mxu0 %v154
    %v245 = vpop.f32.mrb[0].mxu0
    %v246 = vadd.f32 0.0, %v245
    %v247 = vpop.f32.mrb[0].mxu0
    %v248 = vpop.f32.mrb[0].mxu0
    %v249 = vadd.f32 0.0, %v248
    %v250 = vpop.f32.mrb[0].mxu0
    %251 = vmatprep.mubr.bf16.mxu0 0
    %252 = vmatmul.mubr.bf16.gmra.mrb[0].mxu0 %v157
    %v253 = vpop.f32.mrb[0].mxu0
    %v254 = vadd.f32 0.0, %v253
    %v255 = vpop.f32.mrb[0].mxu0
    %v256 = vpop.f32.mrb[0].mxu0
    %v257 = vadd.f32 0.0, %v256
    %v258 = vpop.f32.mrb[0].mxu0
    %259 = vmatprep.mubr.bf16.mxu0 0
    %260 = vmatmul.mubr.bf16.gmra.mrb[0].mxu0 %v160
    %v261 = vpop.f32.mrb[0].mxu0
    %v262 = vadd.f32 0.0, %v261
    %v263 = vpop.f32.mrb[0].mxu0
    %v264 = vpop.f32.mrb[0].mxu0
    %v265 = vadd.f32 0.0, %v264
    %v266 = vpop.f32.mrb[0].mxu0
    %267 = vmatprep.mubr.bf16.mxu0 0
    %268 = vmatmul.mubr.bf16.gmra.mrb[0].mxu0 %v163
    %v269 = vpop.f32.mrb[0].mxu0
    %v270 = vadd.f32 0.0, %v269
    %v271 = vpop.f32.mrb[0].mxu0
    %v272 = vpop.f32.mrb[0].mxu0
    %v273 = vadd.f32 0.0, %v272
    %v274 = vpop.f32.mrb[0].mxu0
    %275 = vmatprep.mubr.bf16.mxu0 0
    %276 = vmatmul.mubr.bf16.gmra.mrb[0].mxu0 %v166
    %v277 = vpop.f32.mrb[0].mxu0
    %v278 = vadd.f32 0.0, %v277
    %v279 = vpop.f32.mrb[0].mxu0
    %v280 = vpop.f32.mrb[0].mxu0
    %v281 = vadd.f32 0.0, %v280
    %v282 = vpop.f32.mrb[0].mxu0
    %283 = vmatprep.mubr.bf16.mxu0 0
    %284 = vmatmul.mubr.bf16.gmra.mrb[0].mxu0 %v169
    %v285 = vpop.f32.mrb[0].mxu0
    %v286 = vadd.f32 0.0, %v285
    %v287 = vpop.f32.mrb[0].mxu0
    %v288 = vpop.f32.mrb[0].mxu0
    %v289 = vadd.f32 0.0, %v288
    %v290 = vpop.f32.mrb[0].mxu0
    %291 = vmatprep.mubr.bf16.mxu0 0
    %292 = vmatmul.mubr.bf16.gmra.mrb[0].mxu0 %v172
    %v293 = vpop.f32.mrb[0].mxu0
    %v294 = vadd.f32 0.0, %v293
    %v295 = vpop.f32.mrb[0].mxu0
    %v296 = vpop.f32.mrb[0].mxu0
    %v297 = vadd.f32 0.0, %v296
    %v298 = vpop.f32.mrb[0].mxu0
    %299 = vmatprep.mubr.bf16.mxu0 0
    %300 = vmatmul.mubr.bf16.gmra.mrb[0].mxu0 %v175
    %v301 = vpop.f32.mrb[0].mxu0
    %v302 = vadd.f32 0.0, %v301
    %v303 = vpop.f32.mrb[0].mxu0
    %v304 = vpop.f32.mrb[0].mxu0
    %v305 = vadd.f32 0.0, %v304
    %v306 = vpop.f32.mrb[0].mxu0
    %307 = vmatprep.mubr.bf16.mxu0 0
    %308 = vmatmul.mubr.bf16.gmra.mrb[0].mxu0 %v178
    %v309 = vpop.f32.mrb[0].mxu0
    %v310 = vadd.f32 0.0, %v309
    %v311 = vpop.f32.mrb[0].mxu0
    %v312 = vpop.f32.mrb[0].mxu0
    %v313 = vadd.f32 0.0, %v312
    %v314 = vpop.f32.mrb[0].mxu0
    %315 = vmatprep.mubr.bf16.mxu0 0
    %316 = vmatmul.mubr.bf16.gmra.mrb[0].mxu0 %v181
    %v317 = vpop.f32.mrb[0].mxu0
    %v318 = vadd.f32 0.0, %v317
    %v319 = vpop.f32.mrb[0].mxu0
    %v320 = vpop.f32.mrb[0].mxu0
    %v321 = vadd.f32 0.0, %v320
    %v322 = vpop.f32.mrb[0].mxu0
    %323 = vmatprep.mubr.bf16.mxu0 0
    %324 = vmatmul.mubr.bf16.gmra.mrb[0].mxu0 %v184
    %v325 = vpop.f32.mrb[0].mxu0
    %v326 = vadd.f32 0.0, %v325
    %v327 = vpop.f32.mrb[0].mxu0
    %v328 = vpop.f32.mrb[0].mxu0
    %v329 = vadd.f32 0.0, %v328
    %v330 = vpop.f32.mrb[0].mxu0
    %331 = vmatprep.mubr.bf16.mxu0 0
    %332 = vmatmul.mubr.bf16.gmra.mrb[0].mxu0 %v187
    %v333 = vpop.f32.mrb[0].mxu0
    %v334 = vadd.f32 0.0, %v333
    %v335 = vpop.f32.mrb[0].mxu0
    %v336 = vpop.f32.mrb[0].mxu0
    %v337 = vadd.f32 0.0, %v336
    %v338 = vpop.f32.mrb[0].mxu0
    %339 = vmatprep.mubr.bf16.mxu0 0
    %340 = vmatmul.mubr.bf16.gmra.mrb[0].mxu0 %v190
    %v341 = vpop.f32.mrb[0].mxu0
    %v342 = vadd.f32 0.0, %v341
    %v343 = vpop.f32.mrb[0].mxu0
    %v344 = vpop.f32.mrb[0].mxu0
    %v345 = vadd.f32 0.0, %v344
    %v346 = vpop.f32.mrb[0].mxu0
    %347 = vmatprep.mubr.bf16.mxu0 0
    %348 = vmatmul.mubr.bf16.gmra.mrb[0].mxu0 %v193
    %v349 = vpop.f32.mrb[0].mxu0
    %v350 = vadd.f32 0.0, %v349
    %v351 = vpop.f32.mrb[0].mxu0
    %v352 = vpop.f32.mrb[0].mxu0
    %v353 = vadd.f32 0.0, %v352
    %v354 = vpop.f32.mrb[0].mxu0
    %355 = vdwg.mxu0
    %v356 = vld [vmem:[%s2] sm:$0xff]
    %v357 = vld [vmem:[%s2 + $0x8] sm:$0xff]
    %v358 = vld [vmem:[%s2 + $0x10] sm:$0xff]
    %v359 = vld [vmem:[%s2 + $0x18] sm:$0xff]
    %v360 = vld [vmem:[%s2 + $0x20] sm:$0xff]
    %v361 = vld [vmem:[%s2 + $0x28] sm:$0xff]
    %v362 = vld [vmem:[%s2 + $0x30] sm:$0xff]
    %v363 = vld [vmem:[%s2 + $0x38] sm:$0xff]
    %v364 = vld [vmem:[%s2 + $0x40] sm:$0xff]
    %v365 = vld [vmem:[%s2 + $0x48] sm:$0xff]
    %v366 = vld [vmem:[%s2 + $0x50] sm:$0xff]
    %v367 = vld [vmem:[%s2 + $0x58] sm:$0xff]
    %v368 = vld [vmem:[%s2 + $0x60] sm:$0xff]
    %v369 = vld [vmem:[%s2 + $0x68] sm:$0xff]
    %v370 = vld [vmem:[%s2 + $0x70] sm:$0xff]
    %v371 = vld [vmem:[%s2 + $0x78] sm:$0xff]
    %372 = vmatprep.subr.mxu0 0.0
    %373 = vmatpush1.msra.mxu0 %v356
    %374 = vmatprep.subr.mxu0 0.0
    %375 = vmatpush1.msra.mxu0 %v357
    %376 = vmatprep.subr.mxu0 0.0
    %377 = vmatpush1.msra.mxu0 %v358
    %378 = vmatprep.subr.mxu0 0.0
    %379 = vmatpush1.msra.mxu0 %v359
    %380 = vmatprep.subr.mxu0 0.0
    %381 = vmatpush1.msra.mxu0 %v360
    %382 = vmatprep.subr.mxu0 0.0
    %383 = vmatpush1.msra.mxu0 %v361
    %384 = vmatprep.subr.mxu0 0.0
    %385 = vmatpush1.msra.mxu0 %v362
    %386 = vmatprep.subr.mxu0 0.0
    %387 = vmatpush1.msra.mxu0 %v363
    %388 = vmatprep.subr.mxu0 0.0
    %389 = vmatpush1.msra.mxu0 %v364
    %390 = vmatprep.subr.mxu0 0.0
    %391 = vmatpush1.msra.mxu0 %v365
    %392 = vmatprep.subr.mxu0 0.0
    %393 = vmatpush1.msra.mxu0 %v366
    %394 = vmatprep.subr.mxu0 0.0
    %395 = vmatpush1.msra.mxu0 %v367
    %396 = vmatprep.subr.mxu0 0.0
    %397 = vmatpush1.msra.mxu0 %v368
    %398 = vmatprep.subr.mxu0 0.0
    %399 = vmatpush1.msra.mxu0 %v369
    %400 = vmatprep.subr.mxu0 0.0
    %401 = vmatpush1.msra.mxu0 %v370
    %402 = vmatprep.subr.mxu0 0.0
    %403 = vmatpush1.msra.mxu0 %v371
    %404 = vmatprep.subr.mxu0 0.0
    %405 = vmatpush1.msra.mxu0 0.0
    %406 = vmatprep.subr.mxu0 0.0
    %407 = vmatpush1.msra.mxu0 0.0
    %408 = vmatprep.subr.mxu0 0.0
    %409 = vmatpush1.msra.mxu0 0.0
    %410 = vmatprep.subr.mxu0 0.0
    %411 = vmatpush1.msra.mxu0 0.0
    %412 = vmatprep.subr.mxu0 0.0
    %413 = vmatpush1.msra.mxu0 0.0
    %414 = vmatprep.subr.mxu0 0.0
    %415 = vmatpush1.msra.mxu0 0.0
    %416 = vmatprep.subr.mxu0 0.0
    %417 = vmatpush1.msra.mxu0 0.0
    %418 = vmatprep.subr.mxu0 0.0
    %419 = vmatpush1.msra.mxu0 0.0
    %420 = vmatprep.subr.mxu0 0.0
    %421 = vmatpush1.msra.mxu0 0.0
    %422 = vmatprep.subr.mxu0 0.0
    %423 = vmatpush1.msra.mxu0 0.0
    %424 = vmatprep.subr.mxu0 0.0
    %425 = vmatpush1.msra.mxu0 0.0
    %426 = vmatprep.subr.mxu0 0.0
    %427 = vmatpush1.msra.mxu0 0.0
    %428 = vmatprep.subr.mxu0 0.0
    %429 = vmatpush1.msra.mxu0 0.0
    %430 = vmatprep.subr.mxu0 0.0
    %431 = vmatpush1.msra.mxu0 0.0
    %432 = vmatprep.subr.mxu0 0.0
    %433 = vmatpush1.msra.mxu0 0.0
    %434 = vmatprep.subr.mxu0 0.0
    %435 = vmatpush1.msra.mxu0 0.0
    %436 = vmatprep.mubr.f32.mxu0 0.0
    %437 = vmatmul.mubr.f32.gmra.mrb[0].mxu0 %v230
    %v438 = vpop.f32.mrb[0].mxu0
    %v439 = vadd.f32 0.0, %v438
    %v440 = vpop.f32.mrb[0].mxu0
    %441 = vmatprep.mubr.f32.mxu0 0.0
    %442 = vmatmul.mubr.f32.gmra.mrb[0].mxu0 %v233
    %v443 = vpop.f32.mrb[0].mxu0
    %v444 = vadd.f32 0.0, %v443
    %v445 = vpop.f32.mrb[0].mxu0
    %446 = vmatprep.mubr.f32.mxu0 0.0
    %447 = vmatmul.mubr.f32.gmra.mrb[0].mxu0 %v238
    %v448 = vpop.f32.mrb[0].mxu0
    %v449 = vadd.f32 0.0, %v448
    %v450 = vpop.f32.mrb[0].mxu0
    %451 = vmatprep.mubr.f32.mxu0 0.0
    %452 = vmatmul.mubr.f32.gmra.mrb[0].mxu0 %v241
    %v453 = vpop.f32.mrb[0].mxu0
    %v454 = vadd.f32 0.0, %v453
    %v455 = vpop.f32.mrb[0].mxu0
    %456 = vmatprep.mubr.f32.mxu0 0.0
    %457 = vmatmul.mubr.f32.gmra.mrb[0].mxu0 %v246
    %v458 = vpop.f32.mrb[0].mxu0
    %v459 = vadd.f32 0.0, %v458
    %v460 = vpop.f32.mrb[0].mxu0
    %461 = vmatprep.mubr.f32.mxu0 0.0
    %462 = vmatmul.mubr.f32.gmra.mrb[0].mxu0 %v249
    %v463 = vpop.f32.mrb[0].mxu0
    %v464 = vadd.f32 0.0, %v463
    %v465 = vpop.f32.mrb[0].mxu0
    %466 = vmatprep.mubr.f32.mxu0 0.0
    %467 = vmatmul.mubr.f32.gmra.mrb[0].mxu0 %v254
    %v468 = vpop.f32.mrb[0].mxu0
    %v469 = vadd.f32 0.0, %v468
    %v470 = vpop.f32.mrb[0].mxu0
    %471 = vmatprep.mubr.f32.mxu0 0.0
    %472 = vmatmul.mubr.f32.gmra.mrb[0].mxu0 %v257
    %v473 = vpop.f32.mrb[0].mxu0
    %v474 = vadd.f32 0.0, %v473
    %v475 = vpop.f32.mrb[0].mxu0
    %476 = vmatprep.mubr.f32.mxu0 0.0
    %477 = vmatmul.mubr.f32.gmra.mrb[0].mxu0 %v262
    %v478 = vpop.f32.mrb[0].mxu0
    %v479 = vadd.f32 0.0, %v478
    %v480 = vpop.f32.mrb[0].mxu0
    %481 = vmatprep.mubr.f32.mxu0 0.0
    %482 = vmatmul.mubr.f32.gmra.mrb[0].mxu0 %v265
    %v483 = vpop.f32.mrb[0].mxu0
    %v484 = vadd.f32 0.0, %v483
    %v485 = vpop.f32.mrb[0].mxu0
    %486 = vmatprep.mubr.f32.mxu0 0.0
    %487 = vmatmul.mubr.f32.gmra.mrb[0].mxu0 %v270
    %v488 = vpop.f32.mrb[0].mxu0
    %v489 = vadd.f32 0.0, %v488
    %v490 = vpop.f32.mrb[0].mxu0
    %491 = vmatprep.mubr.f32.mxu0 0.0
    %492 = vmatmul.mubr.f32.gmra.mrb[0].mxu0 %v273
    %v493 = vpop.f32.mrb[0].mxu0
    %v494 = vadd.f32 0.0, %v493
    %v495 = vpop.f32.mrb[0].mxu0
    %496 = vmatprep.mubr.f32.mxu0 0.0
    %497 = vmatmul.mubr.f32.gmra.mrb[0].mxu0 %v278
    %v498 = vpop.f32.mrb[0].mxu0
    %v499 = vadd.f32 0.0, %v498
    %v500 = vpop.f32.mrb[0].mxu0
    %501 = vmatprep.mubr.f32.mxu0 0.0
    %502 = vmatmul.mubr.f32.gmra.mrb[0].mxu0 %v281
    %v503 = vpop.f32.mrb[0].mxu0
    %v504 = vadd.f32 0.0, %v503
    %v505 = vpop.f32.mrb[0].mxu0
    %506 = vmatprep.mubr.f32.mxu0 0.0
    %507 = vmatmul.mubr.f32.gmra.mrb[0].mxu0 %v286
    %v508 = vpop.f32.mrb[0].mxu0
    %v509 = vadd.f32 0.0, %v508
    %v510 = vpop.f32.mrb[0].mxu0
    %511 = vmatprep.mubr.f32.mxu0 0.0
    %512 = vmatmul.mubr.f32.gmra.mrb[0].mxu0 %v289
    %v513 = vpop.f32.mrb[0].mxu0
    %v514 = vadd.f32 0.0, %v513
    %v515 = vpop.f32.mrb[0].mxu0
    %516 = vmatprep.mubr.f32.mxu0 0.0
    %517 = vmatmul.mubr.f32.gmra.mrb[0].mxu0 %v294
    %v518 = vpop.f32.mrb[0].mxu0
    %v519 = vadd.f32 0.0, %v518
    %v520 = vpop.f32.mrb[0].mxu0
    %521 = vmatprep.mubr.f32.mxu0 0.0
    %522 = vmatmul.mubr.f32.gmra.mrb[0].mxu0 %v297
    %v523 = vpop.f32.mrb[0].mxu0
    %v524 = vadd.f32 0.0, %v523
    %v525 = vpop.f32.mrb[0].mxu0
    %526 = vmatprep.mubr.f32.mxu0 0.0
    %527 = vmatmul.mubr.f32.gmra.mrb[0].mxu0 %v302
    %v528 = vpop.f32.mrb[0].mxu0
    %v529 = vadd.f32 0.0, %v528
    %v530 = vpop.f32.mrb[0].mxu0
    %531 = vmatprep.mubr.f32.mxu0 0.0
    %532 = vmatmul.mubr.f32.gmra.mrb[0].mxu0 %v305
    %v533 = vpop.f32.mrb[0].mxu0
    %v534 = vadd.f32 0.0, %v533
    %v535 = vpop.f32.mrb[0].mxu0
    %536 = vmatprep.mubr.f32.mxu0 0.0
    %537 = vmatmul.mubr.f32.gmra.mrb[0].mxu0 %v310
    %v538 = vpop.f32.mrb[0].mxu0
    %v539 = vadd.f32 0.0, %v538
    %v540 = vpop.f32.mrb[0].mxu0
    %541 = vmatprep.mubr.f32.mxu0 0.0
    %542 = vmatmul.mubr.f32.gmra.mrb[0].mxu0 %v313
    %v543 = vpop.f32.mrb[0].mxu0
    %v544 = vadd.f32 0.0, %v543
    %v545 = vpop.f32.mrb[0].mxu0
    %546 = vmatprep.mubr.f32.mxu0 0.0
    %547 = vmatmul.mubr.f32.gmra.mrb[0].mxu0 %v318
    %v548 = vpop.f32.mrb[0].mxu0
    %v549 = vadd.f32 0.0, %v548
    %v550 = vpop.f32.mrb[0].mxu0
    %551 = vmatprep.mubr.f32.mxu0 0.0
    %552 = vmatmul.mubr.f32.gmra.mrb[0].mxu0 %v321
    %v553 = vpop.f32.mrb[0].mxu0
    %v554 = vadd.f32 0.0, %v553
    %v555 = vpop.f32.mrb[0].mxu0
    %556 = vmatprep.mubr.f32.mxu0 0.0
    %557 = vmatmul.mubr.f32.gmra.mrb[0].mxu0 %v326
    %v558 = vpop.f32.mrb[0].mxu0
    %v559 = vadd.f32 0.0, %v558
    %v560 = vpop.f32.mrb[0].mxu0
    %561 = vmatprep.mubr.f32.mxu0 0.0
    %562 = vmatmul.mubr.f32.gmra.mrb[0].mxu0 %v329
    %v563 = vpop.f32.mrb[0].mxu0
    %v564 = vadd.f32 0.0, %v563
    %v565 = vpop.f32.mrb[0].mxu0
    %566 = vmatprep.mubr.f32.mxu0 0.0
    %567 = vmatmul.mubr.f32.gmra.mrb[0].mxu0 %v334
    %v568 = vpop.f32.mrb[0].mxu0
    %v569 = vadd.f32 0.0, %v568
    %v570 = vpop.f32.mrb[0].mxu0
    %571 = vmatprep.mubr.f32.mxu0 0.0
    %572 = vmatmul.mubr.f32.gmra.mrb[0].mxu0 %v337
    %v573 = vpop.f32.mrb[0].mxu0
    %v574 = vadd.f32 0.0, %v573
    %v575 = vpop.f32.mrb[0].mxu0
    %576 = vmatprep.mubr.f32.mxu0 0.0
    %577 = vmatmul.mubr.f32.gmra.mrb[0].mxu0 %v342
    %v578 = vpop.f32.mrb[0].mxu0
    %v579 = vadd.f32 0.0, %v578
    %v580 = vpop.f32.mrb[0].mxu0
    %581 = vmatprep.mubr.f32.mxu0 0.0
    %582 = vmatmul.mubr.f32.gmra.mrb[0].mxu0 %v345
    %v583 = vpop.f32.mrb[0].mxu0
    %v584 = vadd.f32 0.0, %v583
    %v585 = vpop.f32.mrb[0].mxu0
    %586 = vmatprep.mubr.f32.mxu0 0.0
    %587 = vmatmul.mubr.f32.gmra.mrb[0].mxu0 %v350
    %v588 = vpop.f32.mrb[0].mxu0
    %v589 = vadd.f32 0.0, %v588
    %v590 = vpop.f32.mrb[0].mxu0
    %591 = vmatprep.mubr.f32.mxu0 0.0
    %592 = vmatmul.mubr.f32.gmra.mrb[0].mxu0 %v353
    %v593 = vpop.f32.mrb[0].mxu0
    %v594 = vadd.f32 0.0, %v593
    %v595 = vpop.f32.mrb[0].mxu0
    %596 = vdwg.mxu0
    %vm597 = vcmask 64512
    %598 = vst.msk [vmem:[%s4] sm:$0xff] %vm597, %v439
    %599 = vst.msk [vmem:[%s4 + $0x8] sm:$0xff] %vm597, %v444
    %600 = vst.msk [vmem:[%s4 + $0x10] sm:$0xff] %vm597, %v449
    %601 = vst.msk [vmem:[%s4 + $0x18] sm:$0xff] %vm597, %v454
    %602 = vst.msk [vmem:[%s4 + $0x20] sm:$0xff] %vm597, %v459
    %603 = vst.msk [vmem:[%s4 + $0x28] sm:$0xff] %vm597, %v464
    %604 = vst.msk [vmem:[%s4 + $0x30] sm:$0xff] %vm597, %v469
    %605 = vst.msk [vmem:[%s4 + $0x38] sm:$0xff] %vm597, %v474
    %606 = vst.msk [vmem:[%s4 + $0x40] sm:$0xff] %vm597, %v479
    %607 = vst.msk [vmem:[%s4 + $0x48] sm:$0xff] %vm597, %v484
    %608 = vst.msk [vmem:[%s4 + $0x50] sm:$0xff] %vm597, %v489
    %609 = vst.msk [vmem:[%s4 + $0x58] sm:$0xff] %vm597, %v494
    %610 = vst.msk [vmem:[%s4 + $0x60] sm:$0xff] %vm597, %v499
    %611 = vst.msk [vmem:[%s4 + $0x68] sm:$0xff] %vm597, %v504
    %612 = vst.msk [vmem:[%s4 + $0x70] sm:$0xff] %vm597, %v509
    %613 = vst.msk [vmem:[%s4 + $0x78] sm:$0xff] %vm597, %v514
    %614 = vst.msk [vmem:[%s4 + $0x80] sm:$0xff] %vm597, %v519
    %615 = vst.msk [vmem:[%s4 + $0x88] sm:$0xff] %vm597, %v524
    %616 = vst.msk [vmem:[%s4 + $0x90] sm:$0xff] %vm597, %v529
    %617 = vst.msk [vmem:[%s4 + $0x98] sm:$0xff] %vm597, %v534
    %618 = vst.msk [vmem:[%s4 + $0xa0] sm:$0xff] %vm597, %v539
    %619 = vst.msk [vmem:[%s4 + $0xa8] sm:$0xff] %vm597, %v544
    %620 = vst.msk [vmem:[%s4 + $0xb0] sm:$0xff] %vm597, %v549
    %621 = vst.msk [vmem:[%s4 + $0xb8] sm:$0xff] %vm597, %v554
    %622 = vst.msk [vmem:[%s4 + $0xc0] sm:$0xff] %vm597, %v559
    %623 = vst.msk [vmem:[%s4 + $0xc8] sm:$0xff] %vm597, %v564
    %624 = vst.msk [vmem:[%s4 + $0xd0] sm:$0xff] %vm597, %v569
    %625 = vst.msk [vmem:[%s4 + $0xd8] sm:$0xff] %vm597, %v574
    %626 = vst.msk [vmem:[%s4 + $0xe0] sm:$0xff] %vm597, %v579
    %627 = vst.msk [vmem:[%s4 + $0xe8] sm:$0xff] %vm597, %v584
    %628 = vst.msk [vmem:[%s4 + $0xf0] sm:$0xff] %vm597, %v589
    %629 = vst.msk [vmem:[%s4 + $0xf8] sm:$0xff] %vm597, %v594
    %v630 = vpack.c.bf16 %v233, %v230
    %v631 = vpack.c.bf16 %v241, %v238
    %v632 = vpack.c.bf16 %v249, %v246
    %v633 = vpack.c.bf16 %v257, %v254
    %v634 = vpack.c.bf16 %v265, %v262
    %v635 = vpack.c.bf16 %v273, %v270
    %v636 = vpack.c.bf16 %v281, %v278
    %v637 = vpack.c.bf16 %v289, %v286
    %v638 = vpack.c.bf16 %v297, %v294
    %v639 = vpack.c.bf16 %v305, %v302
    %v640 = vpack.c.bf16 %v313, %v310
    %v641 = vpack.c.bf16 %v321, %v318
    %v642 = vpack.c.bf16 %v329, %v326
    %v643 = vpack.c.bf16 %v337, %v334
    %v644 = vpack.c.bf16 %v345, %v342
    %v645 = vpack.c.bf16 %v353, %v350
    %v662 = vunpack.c.l.b16 %v630
    %v663 = vunpack.c.h.b16 %v630
    %v664 = vunpack.c.l.b16 %v631
    %v665 = vunpack.c.h.b16 %v631
    %v666 = vunpack.c.l.b16 %v632
    %v667 = vunpack.c.h.b16 %v632
    %v668 = vunpack.c.l.b16 %v633
    %v669 = vunpack.c.h.b16 %v633
    %v670 = vunpack.c.l.b16 %v634
    %v671 = vunpack.c.h.b16 %v634
    %v672 = vunpack.c.l.b16 %v635
    %v673 = vunpack.c.h.b16 %v635
    %v674 = vunpack.c.l.b16 %v636
    %v675 = vunpack.c.h.b16 %v636
    %v676 = vunpack.c.l.b16 %v637
    %v677 = vunpack.c.h.b16 %v637
    %v678 = vunpack.c.l.b16 %v638
    %v679 = vunpack.c.h.b16 %v638
    %v680 = vunpack.c.l.b16 %v639
    %v681 = vunpack.c.h.b16 %v639
    %v682 = vunpack.c.l.b16 %v640
    %v683 = vunpack.c.h.b16 %v640
    %v684 = vunpack.c.l.b16 %v641
    %v685 = vunpack.c.h.b16 %v641
    %v686 = vunpack.c.l.b16 %v642
    %v687 = vunpack.c.h.b16 %v642
    %v688 = vunpack.c.l.b16 %v643
    %v689 = vunpack.c.h.b16 %v643
    %v690 = vunpack.c.l.b16 %v644
    %v691 = vunpack.c.h.b16 %v644
    %v692 = vunpack.c.l.b16 %v645
    %v693 = vunpack.c.h.b16 %v645
    %v694 = vpack.c.b16 %v662, %v662
    %v695 = vpack.c.b16 %v663, %v663
    %v696 = vpack.c.b16 %v664, %v664
    %v697 = vpack.c.b16 %v665, %v665
    %v698 = vpack.c.b16 %v666, %v666
    %v699 = vpack.c.b16 %v667, %v667
    %v700 = vpack.c.b16 %v668, %v668
    %v701 = vpack.c.b16 %v669, %v669
    %v702 = vpack.c.b16 %v670, %v670
    %v703 = vpack.c.b16 %v671, %v671
    %v704 = vpack.c.b16 %v672, %v672
    %v705 = vpack.c.b16 %v673, %v673
    %v706 = vpack.c.b16 %v674, %v674
    %v707 = vpack.c.b16 %v675, %v675
    %v708 = vpack.c.b16 %v676, %v676
    %v709 = vpack.c.b16 %v677, %v677
    %v710 = vpack.c.b16 %v678, %v678
    %v711 = vpack.c.b16 %v679, %v679
    %v712 = vpack.c.b16 %v680, %v680
    %v713 = vpack.c.b16 %v681, %v681
    %v714 = vpack.c.b16 %v682, %v682
    %v715 = vpack.c.b16 %v683, %v683
    %v716 = vpack.c.b16 %v684, %v684
    %v717 = vpack.c.b16 %v685, %v685
    %v718 = vpack.c.b16 %v686, %v686
    %v719 = vpack.c.b16 %v687, %v687
    %v720 = vpack.c.b16 %v688, %v688
    %v721 = vpack.c.b16 %v689, %v689
    %v722 = vpack.c.b16 %v690, %v690
    %v723 = vpack.c.b16 %v691, %v691
    %v724 = vpack.c.b16 %v692, %v692
    %v725 = vpack.c.b16 %v693, %v693
    %758 = vst [vmem:[#allocation2] sm:$0xf] %v694
    %759 = vst [vmem:[#allocation2 + $0x4] sm:$0xf] %v695
    %760 = vst [vmem:[#allocation2 + $0x8] sm:$0xf] %v696
    %761 = vst [vmem:[#allocation2 + $0xc] sm:$0xf] %v697
    %762 = vst [vmem:[#allocation2 + $0x10] sm:$0xf] %v698
    %763 = vst [vmem:[#allocation2 + $0x14] sm:$0xf] %v699
    %764 = vst [vmem:[#allocation2 + $0x18] sm:$0xf] %v700
    %765 = vst [vmem:[#allocation2 + $0x1c] sm:$0xf] %v701
    %766 = vst [vmem:[#allocation2 + $0x20] sm:$0xf] %v702
    %767 = vst [vmem:[#allocation2 + $0x24] sm:$0xf] %v703
    %768 = vst [vmem:[#allocation2 + $0x28] sm:$0xf] %v704
    %769 = vst [vmem:[#allocation2 + $0x2c] sm:$0xf] %v705
    %770 = vst [vmem:[#allocation2 + $0x30] sm:$0xf] %v706
    %771 = vst [vmem:[#allocation2 + $0x34] sm:$0xf] %v707
    %772 = vst [vmem:[#allocation2 + $0x38] sm:$0xf] %v708
    %773 = vst [vmem:[#allocation2 + $0x3c] sm:$0xf] %v709
    %774 = vst [vmem:[#allocation2 + $0x40] sm:$0xf] %v710
    %775 = vst [vmem:[#allocation2 + $0x44] sm:$0xf] %v711
    %776 = vst [vmem:[#allocation2 + $0x48] sm:$0xf] %v712
    %777 = vst [vmem:[#allocation2 + $0x4c] sm:$0xf] %v713
    %778 = vst [vmem:[#allocation2 + $0x50] sm:$0xf] %v714
    %779 = vst [vmem:[#allocation2 + $0x54] sm:$0xf] %v715
    %780 = vst [vmem:[#allocation2 + $0x58] sm:$0xf] %v716
    %781 = vst [vmem:[#allocation2 + $0x5c] sm:$0xf] %v717
    %782 = vst [vmem:[#allocation2 + $0x60] sm:$0xf] %v718
    %783 = vst [vmem:[#allocation2 + $0x64] sm:$0xf] %v719
    %784 = vst [vmem:[#allocation2 + $0x68] sm:$0xf] %v720
    %785 = vst [vmem:[#allocation2 + $0x6c] sm:$0xf] %v721
    %786 = vst [vmem:[#allocation2 + $0x70] sm:$0xf] %v722
    %787 = vst [vmem:[#allocation2 + $0x74] sm:$0xf] %v723
    %788 = vst [vmem:[#allocation2 + $0x78] sm:$0xf] %v724
    %789 = vst [vmem:[#allocation2 + $0x7c] sm:$0xf] %v725
    // Predicated region
    $region14: #{tpu_custom_call.1} parent=1 // pred_check
      _
    $region15: #{tpu_custom_call.1} parent=1 // pred_check_branch
      %791 = sbr.rel (0) target = $region17
    $region16: #{tpu_custom_call.1} parent=1 // pred_region
      %s793 = ssub.s32 2048, 2048
      %794 = vsyncadd [#allocation3], %s793
      %s795 = sshll.u32 [#allocation2], 4
      %s796 = int_to_ptr.vmem [resolvable:$true] %s795
      %801 = dma.vmem_to_hbm [thread:$0]  %s796, 2048, %s3, [#allocation3], 64, 64, 4
    $region17: #{tpu_custom_call.1} parent=1 // pred_fallthru
      _
    // Predicated region
    $region18: #{tpu_custom_call.1} parent=1 // pred_check
      _
    $region19: #{tpu_custom_call.1} parent=1 // pred_check_branch
      %803 = sbr.rel (0) target = $region21
    $region20: #{tpu_custom_call.1} parent=1 // pred_region
      _
    $region21: #{tpu_custom_call.1} parent=1 // pred_fallthru
      _
    // Predicated region
    $region22: #{tpu_custom_call.1} parent=1 // pred_check
      _
    $region23: #{tpu_custom_call.1} parent=1 // pred_check_branch
      %805 = sbr.rel (0) target = $region25
    $region24: #{tpu_custom_call.1} parent=1 // pred_region
      %806 = dma.done [#allocation3], 2048
    $region25: #{tpu_custom_call.1} parent=1 // pred_fallthru
      _
    // Predicated region
    $region26: #{tpu_custom_call.1} parent=1 // pred_check
      _
    $region27: #{tpu_custom_call.1} parent=1 // pred_check_branch
      %808 = sbr.rel (0) target = $region29
    $region28: #{tpu_custom_call.1} parent=1 // pred_region
      _
    $region29: #{tpu_custom_call.1} parent=1 // pred_fallthru
      _
    %809 = vsyncpa [#allocation3], 1

</llo_original>
